<compile_context>
chip_gen: v5e
topology: v5e:2x2
jax: 0.10.0
libtpu: 0.0.40
codegen_flags: <defaults>
</compile_context>

<pallas_src>
import jax
import jax.numpy as jnp
from jax import lax
from jax.experimental import pallas as pl
from jax.experimental.pallas import tpu as pltpu


def sense_ranker_kernel(bpe_ref,        # VMEM [Bt, 1, P]     int32
                        layers_ref,     # VMEM [4, Bt, S, H]  f32/bf16
                        de_ref,         # VMEM [Bt, P, D, 2H] f32/bf16
                        bpes_out_ref,   # VMEM [Bt, P, 2H]    f32
                        scores_out_ref  # VMEM [Bt, P, D]     f32
                        ):
    _, Bt, S, H = layers_ref.shape
    P = bpes_out_ref.shape[1]
    cdtype = layers_ref.dtype

    # One vectorized read of the BPE positions (no per-position scalar unroll).
    idx = bpe_ref[...][:, 0, :]                                     # [Bt, P] i32
    iota_s = lax.broadcasted_iota(jnp.int32, (Bt, P, S), 2)
    onehot = (iota_s == idx[:, :, None]).astype(cdtype)             # [Bt, P, S]

    # Gather the BPE rows from each of the last-4 layers on the MXU and sum the
    # gathered [Bt,P,H] tiles in f32: fuses torch.sum(torch.stack(outputs[-4:]))
    # into the gather (only P rows are summed instead of all S).
    g = jnp.einsum('bps,bsh->bph', onehot, layers_ref[0],
                   preferred_element_type=jnp.float32)
    for l in range(1, 4):
        g = g + jnp.einsum('bps,bsh->bph', onehot, layers_ref[l],
                           preferred_element_type=jnp.float32)      # [Bt, P, H]

    # F.normalize(cat(g, g), p=2, eps=1e-12): ||cat(g,g)||^2 = 2*sum(g^2),
    # and max(norm, eps) == sqrt(max(norm^2, eps^2)) -> clamp then rsqrt (EUP).
    sq2 = 2.0 * jnp.sum(g * g, axis=-1, keepdims=True)              # [Bt, P, 1]
    nh = g * lax.rsqrt(jnp.maximum(sq2, 1e-24))                     # [Bt, P, H]

    # bpes = cat(nh, nh): only the half is ever computed/normalized.
    bpes_out_ref[...] = jnp.concatenate([nh, nh], axis=-1).astype(
        bpes_out_ref.dtype)

    # doc_scores = bmm(bpes.unsqueeze(1), doc_embeds.transpose(1,2)).squeeze(1)
    # Exploiting the duplicated halves: score = nh . (doc[:H] + doc[H:]).
    # With D = n_docs_retrieved (=2) this contraction is ~1 FLOP per doc_embeds
    # byte, fully hidden under the doc_embeds DMA, so it stays on the VPU/XLU.
    de = de_ref[...]                                                # [Bt,P,D,2H]
    de_half = (de[..., :H] + de[..., H:]).astype(jnp.float32)       # [Bt,P,D,H]
    scores = jnp.sum(nh[:, :, None, :] * de_half, axis=-1)          # [Bt, P, D]
    scores_out_ref[...] = scores.astype(scores_out_ref.dtype)


def _pick_block_b(B, per_batch_bytes, budget_bytes):
    """Largest divisor of B whose double-buffered working set fits the budget,
    preferring to keep >=2 grid steps (v7x has 2 TensorCores per chip)."""
    divisors = [d for d in range(1, B + 1) if B % d == 0]
    fitting = [d for d in divisors if 2 * d * per_batch_bytes <= budget_bytes]
    if not fitting:
        fitting = [1]
    multi = [d for d in fitting if B // d >= 2]
    return max(multi) if multi else max(fitting)


def sense_ranker_pallas(layers, bpe_pos, doc_embeds, *, block_b=None,
                        vmem_limit_bytes=32 * 1024 * 1024):
    """layers: [4, B, S, H] f32/bf16; bpe_pos: [B, P] int32 (-1 = pad);
    doc_embeds: [B, P, D, 2H] f32/bf16. Returns (bpes [B,P,2H], scores [B,P,D])
    in f32 (accumulation / normalization epilogue is always f32)."""
    L, B, S, H = layers.shape
    Bd, P, D, H2 = doc_embeds.shape
    assert L == 4 and Bd == B and H2 == 2 * H and bpe_pos.shape == (B, P)

    # VMEM working set per batch element (double-buffered by the pipeline).
    per_b = (4 * S * H * layers.dtype.itemsize
             + P * D * H2 * doc_embeds.dtype.itemsize
             + P * H2 * 4 + P * D * 4 + P * 4)
    if block_b is None:
        block_b = _pick_block_b(B, per_b, budget_bytes=(vmem_limit_bytes * 3) // 4)
    assert B % block_b == 0, "block_b must divide B"

    # (B, 1, P) keeps the block's last two dims equal to the full array dims
    # (satisfies the (8,128) tiling rule for the tiny int32 index block).
    bpe3 = bpe_pos.astype(jnp.int32).reshape(B, 1, P)

    grid_spec = pltpu.PrefetchScalarGridSpec(
        num_scalar_prefetch=0,
        grid=(B // block_b,),
        in_specs=[
            pl.BlockSpec((block_b, 1, P), lambda i: (i, 0, 0)),
            pl.BlockSpec((4, block_b, S, H), lambda i: (0, i, 0, 0)),
            pl.BlockSpec((block_b, P, D, H2), lambda i: (i, 0, 0, 0)),
        ],
        out_specs=[
            pl.BlockSpec((block_b, P, H2), lambda i: (i, 0, 0)),
            pl.BlockSpec((block_b, P, D), lambda i: (i, 0, 0)),
        ],
    )
    return pl.pallas_call(
        sense_ranker_kernel,
        out_shape=(
            jax.ShapeDtypeStruct((B, P, H2), jnp.float32),
            jax.ShapeDtypeStruct((B, P, D), jnp.float32),
        ),
        grid_spec=grid_spec,
        compiler_params=pltpu.CompilerParams(
            dimension_semantics=("parallel",),
            vmem_limit_bytes=vmem_limit_bytes),
    )(bpe3, layers, doc_embeds)


def sense_ranker_ref(layers, bpe_pos, doc_embeds):
    """Pure-JAX reference matching the kernel semantics (pad -> zero row)."""
    summed = jnp.sum(layers.astype(jnp.float32), axis=0)              # [B, S, H]
    valid = (bpe_pos >= 0)
    pos = jnp.where(valid, bpe_pos, 0)
    g = jnp.take_along_axis(summed, pos[:, :, None], axis=1)          # [B, P, H]
    g = jnp.where(valid[:, :, None], g, 0.0)
    cat = jnp.concatenate([g, g], axis=-1)                            # [B, P, 2H]
    norm = jnp.sqrt(jnp.sum(cat * cat, axis=-1, keepdims=True))
    normed = cat / jnp.maximum(norm, 1e-12)
    scores = jnp.einsum('bph,bpdh->bpd', normed, doc_embeds.astype(jnp.float32))
    return normed, scores


if __name__ == "__main__":
    # Small shapes consistent with the module: B queries, S BPE positions in the
    # encoded query, H encoder hidden (MODEL_SIZE stand-in), P BPE slots per
    # query, D = n_docs_retrieved = 2.
    B, S, H, P, D = 8, 16, 32, 4, 2
    key = jax.random.PRNGKey(0)
    k1, k2, k3 = jax.random.split(key, 3)

    layers = jax.random.normal(k1, (4, B, S, H), dtype=jnp.float32)
    bpe_pos = jax.random.randint(k2, (B, P), 0, S, dtype=jnp.int32)
    doc_embeds = jax.random.normal(k3, (B, P, D, 2 * H), dtype=jnp.float32)

    bpes_ref, scores_ref = sense_ranker_ref(layers, bpe_pos, doc_embeds)

    # f32 inputs: tight check.
    bpes, scores = sense_ranker_pallas(layers, bpe_pos, doc_embeds)
    jax.block_until_ready((bpes, scores))
    assert jnp.allclose(bpes, bpes_ref, atol=2e-5), "bpes mismatch (f32)"
    assert jnp.allclose(scores, scores_ref, atol=2e-4), "scores mismatch (f32)"

    # bf16 inputs (halved HBM traffic on this memory-bound kernel); the kernel
    # keeps f32 accumulation + f32 epilogue, so only input rounding differs.
    bpes16, scores16 = sense_ranker_pallas(layers.astype(jnp.bfloat16),
                                           bpe_pos,
                                           doc_embeds.astype(jnp.bfloat16))
    jax.block_until_ready((bpes16, scores16))
    assert jnp.allclose(bpes16, bpes_ref, atol=2e-2, rtol=2e-2), \
        "bpes mismatch (bf16)"
    assert jnp.allclose(scores16, scores_ref, atol=1e-1, rtol=1e-1), \
        "scores mismatch (bf16)"

    print("KERNEL_OK")
</pallas_src>

<mosaic_0001>
module attributes {stable_mosaic.version = 11 : i64} {
  func.func @sense_ranker_kernel(%arg0: i32, %arg1: memref<4x1x4xi32, #tpu.memory_space<vmem>>, %arg2: memref<4x4x16x32xf32, #tpu.memory_space<vmem>>, %arg3: memref<4x4x2x64xf32, #tpu.memory_space<vmem>>, %arg4: memref<4x4x64xf32, #tpu.memory_space<vmem>>, %arg5: memref<4x4x2xf32, #tpu.memory_space<vmem>>) attributes {dimension_semantics = [#tpu.dimension_semantics<parallel>], iteration_bounds = array<i64: 2>, scalar_prefetch = 0 : i64, scratch_operands = 0 : i64, tpu.core_type = #tpu.core_type<tc>, window_params = [{transform_indices = @transform_0, window_bounds = array<i64: 4, 1, 4>}, {transform_indices = @transform_1, window_bounds = array<i64: 4, 4, 16, 32>}, {transform_indices = @transform_2, window_bounds = array<i64: 4, 4, 2, 64>}, {transform_indices = @transform_3, window_bounds = array<i64: 4, 4, 64>}, {transform_indices = @transform_4, window_bounds = array<i64: 4, 4, 2>}]} {
    %c0 = arith.constant 0 : index
    %c0_0 = arith.constant 0 : index
    %c0_1 = arith.constant 0 : index
    %0 = vector.load %arg1[%c0, %c0_0, %c0_1] : memref<4x1x4xi32, #tpu.memory_space<vmem>>, vector<4x1x4xi32>
    %1 = vector.shape_cast %0 : vector<4x1x4xi32> to vector<4x4xi32>
    %2 = tpu.iota {dimensions = array<i32: 2>} : vector<4x4x16xi32>
    %3 = vector.shape_cast %1 : vector<4x4xi32> to vector<4x4x1xi32>
    %4 = vector.broadcast %3 : vector<4x4x1xi32> to vector<4x4x16xi32>
    %5 = arith.cmpi eq, %2, %4 : vector<4x4x16xi32>
    %6 = arith.extui %5 : vector<4x4x16xi1> to vector<4x4x16xi32>
    %7 = arith.sitofp %6 : vector<4x4x16xi32> to vector<4x4x16xf32>
    %c0_2 = arith.constant 0 : index
    %c0_3 = arith.constant 0 : index
    %c0_4 = arith.constant 0 : index
    %c0_5 = arith.constant 0 : index
    %8 = vector.load %arg2[%c0_2, %c0_3, %c0_4, %c0_5] : memref<4x4x16x32xf32, #tpu.memory_space<vmem>>, vector<1x4x16x32xf32>
    %9 = vector.shape_cast %8 : vector<1x4x16x32xf32> to vector<4x16x32xf32>
    "tpu.trace_start"() <{level = 10 : i32, message = "bps,bsh->bph"}> : () -> ()
    %cst = arith.constant dense<0.000000e+00> : vector<4x4x32xf32>
    %10 = tpu.matmul %7, %9, %cst {dimension_numbers = #tpu.dot_dimension_numbers<[2], [1], [1], [2], [0, 0, 0, 1, 1, 2], [0], [0]>} : vector<4x4x16xf32>, vector<4x16x32xf32>, vector<4x4x32xf32> -> vector<4x4x32xf32>
    "tpu.trace_stop"() : () -> ()
    %c1 = arith.constant 1 : index
    %c0_6 = arith.constant 0 : index
    %c0_7 = arith.constant 0 : index
    %c0_8 = arith.constant 0 : index
    %11 = vector.load %arg2[%c1, %c0_6, %c0_7, %c0_8] : memref<4x4x16x32xf32, #tpu.memory_space<vmem>>, vector<1x4x16x32xf32>
    %12 = vector.shape_cast %11 : vector<1x4x16x32xf32> to vector<4x16x32xf32>
    "tpu.trace_start"() <{level = 10 : i32, message = "bps,bsh->bph"}> : () -> ()
    %cst_9 = arith.constant dense<0.000000e+00> : vector<4x4x32xf32>
    %13 = tpu.matmul %7, %12, %cst_9 {dimension_numbers = #tpu.dot_dimension_numbers<[2], [1], [1], [2], [0, 0, 0, 1, 1, 2], [0], [0]>} : vector<4x4x16xf32>, vector<4x16x32xf32>, vector<4x4x32xf32> -> vector<4x4x32xf32>
    "tpu.trace_stop"() : () -> ()
    %14 = arith.addf %10, %13 : vector<4x4x32xf32>
    %c2 = arith.constant 2 : index
    %c0_10 = arith.constant 0 : index
    %c0_11 = arith.constant 0 : index
    %c0_12 = arith.constant 0 : index
    %15 = vector.load %arg2[%c2, %c0_10, %c0_11, %c0_12] : memref<4x4x16x32xf32, #tpu.memory_space<vmem>>, vector<1x4x16x32xf32>
    %16 = vector.shape_cast %15 : vector<1x4x16x32xf32> to vector<4x16x32xf32>
    "tpu.trace_start"() <{level = 10 : i32, message = "bps,bsh->bph"}> : () -> ()
    %cst_13 = arith.constant dense<0.000000e+00> : vector<4x4x32xf32>
    %17 = tpu.matmul %7, %16, %cst_13 {dimension_numbers = #tpu.dot_dimension_numbers<[2], [1], [1], [2], [0, 0, 0, 1, 1, 2], [0], [0]>} : vector<4x4x16xf32>, vector<4x16x32xf32>, vector<4x4x32xf32> -> vector<4x4x32xf32>
    "tpu.trace_stop"() : () -> ()
    %18 = arith.addf %14, %17 : vector<4x4x32xf32>
    %c3 = arith.constant 3 : index
    %c0_14 = arith.constant 0 : index
    %c0_15 = arith.constant 0 : index
    %c0_16 = arith.constant 0 : index
    %19 = vector.load %arg2[%c3, %c0_14, %c0_15, %c0_16] : memref<4x4x16x32xf32, #tpu.memory_space<vmem>>, vector<1x4x16x32xf32>
    %20 = vector.shape_cast %19 : vector<1x4x16x32xf32> to vector<4x16x32xf32>
    "tpu.trace_start"() <{level = 10 : i32, message = "bps,bsh->bph"}> : () -> ()
    %cst_17 = arith.constant dense<0.000000e+00> : vector<4x4x32xf32>
    %21 = tpu.matmul %7, %20, %cst_17 {dimension_numbers = #tpu.dot_dimension_numbers<[2], [1], [1], [2], [0, 0, 0, 1, 1, 2], [0], [0]>} : vector<4x4x16xf32>, vector<4x16x32xf32>, vector<4x4x32xf32> -> vector<4x4x32xf32>
    "tpu.trace_stop"() : () -> ()
    %22 = arith.addf %18, %21 : vector<4x4x32xf32>
    %23 = arith.mulf %22, %22 : vector<4x4x32xf32>
    %cst_18 = arith.constant dense<0.000000e+00> : vector<4x4xf32>
    %24 = vector.multi_reduction <add>, %23, %cst_18 [2] : vector<4x4x32xf32> to vector<4x4xf32>
    %25 = vector.shape_cast %24 : vector<4x4xf32> to vector<4x4x1xf32>
    %cst_19 = arith.constant 2.000000e+00 : f32
    %26 = vector.broadcast %cst_19 : f32 to vector<4x4x1xf32>
    %27 = arith.mulf %26, %25 : vector<4x4x1xf32>
    %cst_20 = arith.constant 1.000000e-24 : f32
    %28 = vector.broadcast %cst_20 : f32 to vector<4x4x1xf32>
    %29 = arith.maximumf %27, %28 : vector<4x4x1xf32>
    %30 = math.rsqrt %29 : vector<4x4x1xf32>
    %31 = vector.broadcast %30 : vector<4x4x1xf32> to vector<4x4x32xf32>
    %32 = arith.mulf %22, %31 : vector<4x4x32xf32>
    %33 = tpu.concatenate %32, %32 in 2 : vector<4x4x32xf32>, vector<4x4x32xf32> -> vector<4x4x64xf32>
    %c0_21 = arith.constant 0 : index
    %c0_22 = arith.constant 0 : index
    %c0_23 = arith.constant 0 : index
    %34 = vector.load %arg4[%c0_21, %c0_22, %c0_23] : memref<4x4x64xf32, #tpu.memory_space<vmem>>, vector<4x4x64xf32>
    tpu.vector_store %arg4[%c0_21, %c0_22, %c0_23], %33 {strides = array<i32>} : memref<4x4x64xf32, #tpu.memory_space<vmem>>, vector<4x4x64xf32>,
    %c0_24 = arith.constant 0 : index
    %c0_25 = arith.constant 0 : index
    %c0_26 = arith.constant 0 : index
    %c0_27 = arith.constant 0 : index
    %35 = vector.load %arg3[%c0_24, %c0_25, %c0_26, %c0_27] : memref<4x4x2x64xf32, #tpu.memory_space<vmem>>, vector<4x4x2x64xf32>
    %36 = vector.extract_strided_slice %35 {offsets = [0, 0, 0, 0], sizes = [4, 4, 2, 32], strides = [1, 1, 1, 1]} : vector<4x4x2x64xf32> to vector<4x4x2x32xf32>
    %37 = vector.extract_strided_slice %35 {offsets = [0, 0, 0, 32], sizes = [4, 4, 2, 32], strides = [1, 1, 1, 1]} : vector<4x4x2x64xf32> to vector<4x4x2x32xf32>
    %38 = arith.addf %36, %37 : vector<4x4x2x32xf32>
    %39 = vector.shape_cast %32 : vector<4x4x32xf32> to vector<4x4x1x32xf32>
    %40 = vector.broadcast %39 : vector<4x4x1x32xf32> to vector<4x4x2x32xf32>
    %41 = arith.mulf %40, %38 : vector<4x4x2x32xf32>
    %cst_28 = arith.constant dense<0.000000e+00> : vector<4x4x2xf32>
    %42 = vector.multi_reduction <add>, %41, %cst_28 [3] : vector<4x4x2x32xf32> to vector<4x4x2xf32>
    %c0_29 = arith.constant 0 : index
    %c0_30 = arith.constant 0 : index
    %c0_31 = arith.constant 0 : index
    %43 = vector.load %arg5[%c0_29, %c0_30, %c0_31] : memref<4x4x2xf32, #tpu.memory_space<vmem>>, vector<4x4x2xf32>
    tpu.vector_store %arg5[%c0_29, %c0_30, %c0_31], %42 {strides = array<i32>} : memref<4x4x2xf32, #tpu.memory_space<vmem>>, vector<4x4x2xf32>,
    return
  }
  func.func @transform_0(%arg0: i32) -> (i32, i32, i32) {
    %c0_i32 = arith.constant 0 : i32
    %c0_i32_0 = arith.constant 0 : i32
    %c0_i32_1 = arith.constant 0 : i32
    return %arg0, %c0_i32, %c0_i32_0 : i32, i32, i32
  }
  func.func @transform_1(%arg0: i32) -> (i32, i32, i32, i32) {
    %c0_i32 = arith.constant 0 : i32
    %c0_i32_0 = arith.constant 0 : i32
    %c0_i32_1 = arith.constant 0 : i32
    %c0_i32_2 = arith.constant 0 : i32
    return %c0_i32, %arg0, %c0_i32_0, %c0_i32_1 : i32, i32, i32, i32
  }
  func.func @transform_2(%arg0: i32) -> (i32, i32, i32, i32) {
    %c0_i32 = arith.constant 0 : i32
    %c0_i32_0 = arith.constant 0 : i32
    %c0_i32_1 = arith.constant 0 : i32
    %c0_i32_2 = arith.constant 0 : i32
    return %arg0, %c0_i32, %c0_i32_0, %c0_i32_1 : i32, i32, i32, i32
  }
  func.func @transform_3(%arg0: i32) -> (i32, i32, i32) {
    %c0_i32 = arith.constant 0 : i32
    %c0_i32_0 = arith.constant 0 : i32
    %c0_i32_1 = arith.constant 0 : i32
    return %arg0, %c0_i32, %c0_i32_0 : i32, i32, i32
  }
  func.func @transform_4(%arg0: i32) -> (i32, i32, i32) {
    %c0_i32 = arith.constant 0 : i32
    %c0_i32_0 = arith.constant 0 : i32
    %c0_i32_1 = arith.constant 0 : i32
    return %arg0, %c0_i32, %c0_i32_0 : i32, i32, i32
  }
}

</mosaic_0001>

<llo_original>
// kernel: tpu_custom_call.1
$region0: #{tpu_custom_call.1}
  #allocation0 [shape = 'u32[]', space=smem, size = 0x4, offset = 0x4, fixed_abs, tag = 'smem constant byte address 0x4 - core index']
  #allocation1 [shape = 'u32[72,128]{1,0:T(1,128)}', space=vmem, size = 0x9000, scoped, tag = 'internal scratch']
  #allocation8 [shape = 's32[]', space=sflag, size = 0x4, offset = 0, fixed_abs, tag = 'sflag constant byte address 0x0 - dummy sync flag']
  %s0 = inlined_call_operand.vmem [shape: s32[8,1,4], index: 0, kind: input, shape index: {}]
  %s1 = inlined_call_operand.hbm [shape: f32[4,8,16,32], index: 1, kind: input, shape index: {}]
  %s2 = inlined_call_operand.hbm [shape: f32[8,4,2,64], index: 2, kind: input, shape index: {}]
  %s3 = inlined_call_operand.hbm [shape: f32[8,4,64], index: 3, kind: output, shape index: {0}]
  %s4 = inlined_call_operand.vmem [shape: f32[8,4,2], index: 4, kind: output, shape index: {1}]
  %5 = xla_tuple %s3, %s4
  %s6 = sld [smem:[#allocation0]]
  $region61: #{tpu_custom_call.1} parent=0
    _
  %s8 = ssub.s32 1, %s6
  %s9 = scalar_select 0, %s8, %s6
  $region1: #{tpu_custom_call.1} parent=0
    #allocation2 [shape = 'u8[262144]{0}', space=vmem, size = 0x40000, scoped, tag = 'input window, operand 1']
    #allocation3 [shape = 's32[2]{0}', space=sflag, size = 0x8, scoped, tag = 'scoped memory for tpu_custom_call.1']
    #allocation4 [shape = 's32[2]{0}', space=sflag, size = 0x8, scoped, tag = 'scoped memory for tpu_custom_call.1']
    #allocation5 [shape = 'u8[32768]{0}', space=vmem, size = 0x8000, scoped, tag = 'input window, operand 2']
    #allocation6 [shape = 's32[2]{0}', space=sflag, size = 0x8, scoped, tag = 'scoped memory for tpu_custom_call.1']
    #allocation7 [shape = 'u8[16384]{0}', space=vmem, size = 0x4000, scoped, tag = 'output window, operand 0']
    %10 = vsyncpa [#allocation3], 0
    %s11 = scalar_lea.sflag [#allocation3], 1
    %12 = vsyncpa %s11, 0
    %13 = vsyncpa [#allocation6], 0
    %s14 = scalar_lea.sflag [#allocation6], 1
    %15 = vsyncpa %s14, 0
    %16 = vsyncpa [#allocation4], 0
    %s17 = scalar_lea.sflag [#allocation4], 1
    %18 = vsyncpa %s17, 0
    loop: start=0, step=1, limit=4
    $region2: #{tpu_custom_call.1} parent=1 // loop_pre_header
      _
    $region3: #{tpu_custom_call.1} parent=1 // loop_header
      %s20 = sphi 0, %s24
      %p21 = scmp.ge.s32.totalorder %s20, 4
      %s30 = sphi 0, %s32
      %s33 = sphi 0, %s30
      %s34 = sphi 0, %s33
      %s50 = sphi 0, %s34
      %s56 = sphi 0, %s58
      %s59 = sphi 0, %s56
      %s60 = sphi 0, %s59
      %s76 = sphi 0, %s60
      %s82 = sphi 0, %s84
      %s85 = sphi 0, %s82
      %s86 = sphi 0, %s85
      %s102 = sphi 0, %s86
      %s108 = sphi 0, %s110
      %s111 = sphi 0, %s108
      %s112 = sphi 0, %s111
      %s128 = sphi 0, %s112
      %s134 = sphi 0, %s136
      %s137 = sphi 0, %s134
      %s138 = sphi 0, %s137
      %s154 = sphi 0, %s138
    $region4: #{tpu_custom_call.1} parent=1 // loop_header_branch
      %23 = sbr.rel (%p21) target = $region8
    $region5: #{tpu_custom_call.1} parent=1 // loop_body
      %s25 = ssub.s32 %s20, 1
      %s26 = ssub.s32 %s20, 2
      %s27 = sadd.s32 %s20, 1
      %s28 = ssub.s32 %s20, %s27
      %p29 = scmp.eq.s32.totalorder %s28, 0
      %s31 = sadd.s32 %s30, 1
      %s32 = scalar_select %p29, %s30, %s31
      %p35 = pneg %p29
      %p36 = scmp.eq.s32.totalorder %s20, 1
      %p37 = por %p35, %p36
      %p38 = scmp.ne.s32.totalorder %s30, %s33
      %p39 = scmp.eq.s32.totalorder %s20, 0
      %p40 = por %p38, %p39
      %p41 = scmp.ne.s32.totalorder %s30, %s33
      %p42 = scmp.eq.s32.totalorder %s25, 1
      %p43 = por %p41, %p42
      %p44 = scmp.ne.s32.totalorder %s33, %s34
      %p45 = scmp.eq.s32.totalorder %s25, 0
      %p46 = por %p44, %p45
      %p47 = scmp.ne.s32.totalorder %s33, %s34
      %p48 = scmp.eq.s32.totalorder %s26, 1
      %p49 = por %p47, %p48
      %p51 = scmp.ne.s32.totalorder %s34, %s50
      %p52 = scmp.eq.s32.totalorder %s26, 0
      %p53 = por %p51, %p52
      %s54 = ssub.s32 %s20, %s27
      %p55 = scmp.eq.s32.totalorder %s54, 0
      %s57 = sadd.s32 %s56, 1
      %s58 = scalar_select %p55, %s56, %s57
      %p61 = pneg %p55
      %p62 = scmp.eq.s32.totalorder %s20, 1
      %p63 = por %p61, %p62
      %p64 = scmp.ne.s32.totalorder %s56, %s59
      %p65 = scmp.eq.s32.totalorder %s20, 0
      %p66 = por %p64, %p65
      %p67 = scmp.ne.s32.totalorder %s56, %s59
      %p68 = scmp.eq.s32.totalorder %s25, 1
      %p69 = por %p67, %p68
      %p70 = scmp.ne.s32.totalorder %s59, %s60
      %p71 = scmp.eq.s32.totalorder %s25, 0
      %p72 = por %p70, %p71
      %p73 = scmp.ne.s32.totalorder %s59, %s60
      %p74 = scmp.eq.s32.totalorder %s26, 1
      %p75 = por %p73, %p74
      %p77 = scmp.ne.s32.totalorder %s60, %s76
      %p78 = scmp.eq.s32.totalorder %s26, 0
      %p79 = por %p77, %p78
      %s80 = ssub.s32 %s20, %s27
      %p81 = scmp.eq.s32.totalorder %s80, 0
      %s83 = sadd.s32 %s82, 1
      %s84 = scalar_select %p81, %s82, %s83
      %p87 = pneg %p81
      %p88 = scmp.eq.s32.totalorder %s20, 1
      %p89 = por %p87, %p88
      %p90 = scmp.ne.s32.totalorder %s82, %s85
      %p91 = scmp.eq.s32.totalorder %s20, 0
      %p92 = por %p90, %p91
      %p93 = scmp.ne.s32.totalorder %s82, %s85
      %p94 = scmp.eq.s32.totalorder %s25, 1
      %p95 = por %p93, %p94
      %p96 = scmp.ne.s32.totalorder %s85, %s86
      %p97 = scmp.eq.s32.totalorder %s25, 0
      %p98 = por %p96, %p97
      %p99 = scmp.ne.s32.totalorder %s85, %s86
      %p100 = scmp.eq.s32.totalorder %s26, 1
      %p101 = por %p99, %p100
      %p103 = scmp.ne.s32.totalorder %s86, %s102
      %p104 = scmp.eq.s32.totalorder %s26, 0
      %p105 = por %p103, %p104
      %s106 = ssub.s32 %s20, %s27
      %p107 = scmp.eq.s32.totalorder %s106, 0
      %s109 = sadd.s32 %s108, 1
      %s110 = scalar_select %p107, %s108, %s109
      %p113 = pneg %p107
      %p114 = scmp.eq.s32.totalorder %s20, 1
      %p115 = por %p113, %p114
      %p116 = scmp.ne.s32.totalorder %s108, %s111
      %p117 = scmp.eq.s32.totalorder %s20, 0
      %p118 = por %p116, %p117
      %p119 = scmp.ne.s32.totalorder %s108, %s111
      %p120 = scmp.eq.s32.totalorder %s25, 1
      %p121 = por %p119, %p120
      %p122 = scmp.ne.s32.totalorder %s111, %s112
      %p123 = scmp.eq.s32.totalorder %s25, 0
      %p124 = por %p122, %p123
      %p125 = scmp.ne.s32.totalorder %s111, %s112
      %p126 = scmp.eq.s32.totalorder %s26, 1
      %p127 = por %p125, %p126
      %p129 = scmp.ne.s32.totalorder %s112, %s128
      %p130 = scmp.eq.s32.totalorder %s26, 0
      %p131 = por %p129, %p130
      %s132 = ssub.s32 %s20, %s27
      %p133 = scmp.eq.s32.totalorder %s132, 0
      %s135 = sadd.s32 %s134, 1
      %s136 = scalar_select %p133, %s134, %s135
      %p139 = pneg %p133
      %p140 = scmp.eq.s32.totalorder %s20, 1
      %p141 = por %p139, %p140
      %p142 = scmp.ne.s32.totalorder %s134, %s137
      %p143 = scmp.eq.s32.totalorder %s20, 0
      %p144 = por %p142, %p143
      %p145 = scmp.ne.s32.totalorder %s134, %s137
      %p146 = scmp.eq.s32.totalorder %s25, 1
      %p147 = por %p145, %p146
      %p148 = scmp.ne.s32.totalorder %s137, %s138
      %p149 = scmp.eq.s32.totalorder %s25, 0
      %p150 = por %p148, %p149
      %p151 = scmp.ne.s32.totalorder %s137, %s138
      %p152 = scmp.eq.s32.totalorder %s26, 1
      %p153 = por %p151, %p152
      %p155 = scmp.ne.s32.totalorder %s138, %s154
      %p156 = scmp.eq.s32.totalorder %s26, 0
      %p157 = por %p155, %p156
      %p158 = scmp.le.s32.totalorder 1, %s20
      %p159 = scmp.lt.s32.totalorder %s20, 3
      %p160 = pnand %p158, %p159
      %p161 = pneg %p160
      // Predicated region
      $region9: #{tpu_custom_call.1} parent=5 // pred_check
        _
      $region10: #{tpu_custom_call.1} parent=5 // pred_check_branch
        %163 = sbr.rel (%p160) target = $region12
      $region11: #{tpu_custom_call.1} parent=5 // pred_region
        %s164 = ssub.s32 %s20, 1
      $region12: #{tpu_custom_call.1} parent=5 // pred_fallthru
        _
      %p165 = scmp.lt.s32.totalorder %s20, 2
      // Predicated region
      $region13: #{tpu_custom_call.1} parent=5 // pred_check
        %p166 = pneg %p165
      $region14: #{tpu_custom_call.1} parent=5 // pred_check_branch
        %168 = sbr.rel (%p166) target = $region16
      $region15: #{tpu_custom_call.1} parent=5 // pred_region
        // Predicated region
        $region17: #{tpu_custom_call.1} parent=15 // pred_check
          %p169 = pneg %p40
        $region18: #{tpu_custom_call.1} parent=15 // pred_check_branch
          %171 = sbr.rel (%p169) target = $region20
        $region19: #{tpu_custom_call.1} parent=15 // pred_region
          %s172 = smul.u32 4, %s20
          %p173 = scmp.lt.s32.totalorder %s172, 7
          %s174 = scalar_select %p173, %s172, 7
          %s175 = scalar_lea.vmem %s0, %s174
          %s176 = smul.u32 4, %s20
        $region20: #{tpu_custom_call.1} parent=15 // pred_fallthru
          _
        // Predicated region
        $region21: #{tpu_custom_call.1} parent=15 // pred_check
          %p177 = pneg %p66
        $region22: #{tpu_custom_call.1} parent=15 // pred_check_branch
          %179 = sbr.rel (%p177) target = $region24
        $region23: #{tpu_custom_call.1} parent=15 // pred_region
          #allocation9 [shape = 'u32[6]{0}', space=smem, size = 0x18, scoped, tag = 'DMA stride descriptor']
          %s180 = sand.u32 %s56, 1
          %s181 = scalar_lea.sflag [#allocation3], %s180
          %s182 = sand.u32 %s56, 1
          %s183 = smul.addr %s182, 256
          %s184 = scalar_lea.vmem [#allocation2], %s183
          %s185 = smul.u32 4, %s20
          %187 = vsyncadd %s181, 0
          %s188 = smul.addr %s185, 2
          %s189 = smul.addr %s188, 8
          %s190 = scalar_lea.hbm %s1, %s189
          %s192 = sshll.u32 1, 14
          %s193 = sxor.u32 4294967295, %s192
          %s195 = sld [smem:[#allocation0]]
          %s196 = sadd.s32 2, %s195
          %s198 = sshll.u32 7, 26
          %s199 = sxor.u32 4294967295, %s198
          %s200 = sand.u32 0, %s199
          %s201 = sshll.u32 %s196, 26
          %s202 = sor.u32 %s200, %s201
          %s203 = sshll.u32 %s190, 4
          %s204 = int_to_ptr.hbm [resolvable:$true] %s203
          %s205 = sshll.u32 %s184, 4
          %s206 = int_to_ptr.vmem [resolvable:$true] %s205
          %212 = sst [smem:[#allocation9]] 2048
          %s213 = scalar_lea.smem [#allocation9], 1
          %214 = sst [smem:[%s213]] 1024
          %s215 = scalar_lea.smem [#allocation9], 2
          %216 = sst [smem:[%s215]] 8
          %s217 = scalar_lea.smem [#allocation9], 3
          %218 = sst [smem:[%s217]] 128
          %s219 = scalar_lea.smem [#allocation9], 4
          %220 = sst [smem:[%s219]] 128
          %s221 = scalar_lea.smem [#allocation9], 5
          %222 = sst [smem:[%s221]] 8
          %224 = dma.general %s204, 4096, %s206, %s181, [#allocation8], [#allocation9], %s202, 0
        $region24: #{tpu_custom_call.1} parent=15 // pred_fallthru
          _
        // Predicated region
        $region25: #{tpu_custom_call.1} parent=15 // pred_check
          %p225 = pneg %p92
        $region26: #{tpu_custom_call.1} parent=15 // pred_check_branch
          %227 = sbr.rel (%p225) target = $region28
        $region27: #{tpu_custom_call.1} parent=15 // pred_region
          %s228 = sand.u32 %s82, 1
          %s229 = scalar_lea.sflag [#allocation6], %s228
          %s230 = sand.u32 %s82, 1
          %s231 = smul.addr %s230, 32
          %s232 = scalar_lea.vmem [#allocation5], %s231
          %s233 = smul.u32 4, %s20
          %235 = vsyncadd %s229, 0
          %s236 = smul.addr %s233, 4
          %s237 = smul.addr %s236, 2
          %s238 = scalar_lea.hbm %s2, %s237
          %s239 = sshll.u32 %s238, 4
          %s240 = int_to_ptr.hbm [resolvable:$true] %s239
          %s241 = sshll.u32 %s232, 4
          %s242 = int_to_ptr.vmem [resolvable:$true] %s241
          %247 = dma.hbm_to_vmem [thread:$0]  %s240, 512, %s242, %s229, 32, 32, 2
        $region28: #{tpu_custom_call.1} parent=15 // pred_fallthru
          _
      $region16: #{tpu_custom_call.1} parent=5 // pred_fallthru
        _
      %p248 = scmp.le.s32.totalorder 1, %s20
      %p249 = scmp.lt.s32.totalorder %s20, 3
      %p250 = pnand %p248, %p249
      %p251 = pneg %p250
      // Predicated region
      $region29: #{tpu_custom_call.1} parent=5 // pred_check
        _
      $region30: #{tpu_custom_call.1} parent=5 // pred_check_branch
        %253 = sbr.rel (%p250) target = $region32
      $region31: #{tpu_custom_call.1} parent=5 // pred_region
        %s254 = ssub.s32 %s20, 1
        %s255 = sand.u32 %s59, 1
        %s256 = scalar_lea.sflag [#allocation3], %s255
        %s257 = sand.u32 %s59, 1
        %s258 = smul.addr %s257, 256
        %s259 = scalar_lea.vmem [#allocation2], %s258
        // Predicated region
        $region33: #{tpu_custom_call.1} parent=31 // pred_check
          %p260 = pneg %p72
        $region34: #{tpu_custom_call.1} parent=31 // pred_check_branch
          %262 = sbr.rel (%p260) target = $region36
        $region35: #{tpu_custom_call.1} parent=31 // pred_region
          %264 = dma.done %s256, 4096
        $region36: #{tpu_custom_call.1} parent=31 // pred_fallthru
          _
        %s265 = sand.u32 %s85, 1
        %s266 = scalar_lea.sflag [#allocation6], %s265
        %s267 = sand.u32 %s85, 1
        %s268 = smul.addr %s267, 32
        %s269 = scalar_lea.vmem [#allocation5], %s268
        // Predicated region
        $region37: #{tpu_custom_call.1} parent=31 // pred_check
          %p270 = pneg %p98
        $region38: #{tpu_custom_call.1} parent=31 // pred_check_branch
          %272 = sbr.rel (%p270) target = $region40
        $region39: #{tpu_custom_call.1} parent=31 // pred_region
          %274 = dma.done %s266, 512
        $region40: #{tpu_custom_call.1} parent=31 // pred_fallthru
          _
        %s275 = smul.u32 4, %s25
        %p276 = scmp.lt.s32.totalorder %s275, 7
        %s277 = scalar_select %p276, %s275, 7
        %s278 = scalar_lea.vmem %s0, %s277
        %p279 = pneg %p46
        %p280 = pneg %p43
        %s281 = sand.u32 %s59, 1
        %s282 = scalar_lea.sflag [#allocation3], %s281
        %s283 = sand.u32 %s59, 1
        %s284 = smul.addr %s283, 256
        %s285 = scalar_lea.vmem [#allocation2], %s284
        %p286 = pneg %p72
        %p287 = pneg %p69
        %s288 = sand.u32 %s85, 1
        %s289 = scalar_lea.sflag [#allocation6], %s288
        %s290 = sand.u32 %s85, 1
        %s291 = smul.addr %s290, 32
        %s292 = scalar_lea.vmem [#allocation5], %s291
        %p293 = pneg %p98
        %p294 = pneg %p95
        %p295 = pneg %p124
        %p296 = pneg %p121
        %s297 = sand.u32 %s111, 1
        %s298 = scalar_lea.sflag [#allocation4], %s297
        %s299 = sand.u32 %s111, 1
        %s300 = smul.addr %s299, 16
        %s301 = scalar_lea.vmem [#allocation7], %s300
        %p302 = pneg %p150
        %p303 = pneg %p147
        %s304 = smul.u32 4, %s25
        %p305 = scmp.lt.s32.totalorder %s304, 7
        %s306 = scalar_select %p305, %s304, 7
        %s307 = smul.addr %s306, 4
        %s308 = scalar_lea.vmem %s4, %s307
        %s309 = smul.u32 4, %s25
        %p310 = scmp.lt.s32.totalorder %s309, 7
        %s311 = scalar_select %p310, %s309, 7
        %s312 = scalar_lea.vmem %s0, %s311
        %s313 = smul.u32 4, %s25
        %s314 = smul.u32 4, %s25
        %s315 = smul.u32 4, %s25
        %s316 = smul.u32 4, %s25
        %s317 = smul.u32 4, %s25
        %p318 = scmp.lt.s32.totalorder %s317, 7
        %s319 = scalar_select %p318, %s317, 7
        %s320 = smul.addr %s319, 4
        %s321 = scalar_lea.vmem %s4, %s320
        %s322 = smul.u32 4, %s25
        %v323 = vld [vmem:[%s312] sm:$0x1]
        %v324 = vld [vmem:[%s312 + $0x1] sm:$0x1]
        %v325 = vld [vmem:[%s312 + $0x2] sm:$0x1]
        %v326 = vld [vmem:[%s312 + $0x3] sm:$0x1]
        %v327 = vlaneseq
        %v328 = vand.u32 %v327, 127
        %v329 = vperm.slane %v323, 0
        %v330 = vlaneseq
        %v331 = vshrl.u32 %v330, 7
        %333 = vset.pattern.permute.xlu0 %v331
        %334 = vperm.xlu0 %333, %v329
        %v335 = vpop.permute.xlu0 %334
        %v336 = vperm.slane %v324, 0
        %v337 = vlaneseq
        %v338 = vshrl.u32 %v337, 7
        %340 = vset.pattern.permute.xlu0 %v338
        %341 = vperm.xlu0 %340, %v336
        %v342 = vpop.permute.xlu0 %341
        %v343 = vperm.slane %v325, 0
        %v344 = vlaneseq
        %v345 = vshrl.u32 %v344, 7
        %347 = vset.pattern.permute.xlu0 %v345
        %348 = vperm.xlu0 %347, %v343
        %v349 = vpop.permute.xlu0 %348
        %v350 = vperm.slane %v326, 0
        %v351 = vlaneseq
        %v352 = vshrl.u32 %v351, 7
        %354 = vset.pattern.permute.xlu0 %v352
        %355 = vperm.xlu0 %354, %v350
        %v356 = vpop.permute.xlu0 %355
        %vm357 = vcmp.eq.s32.totalorder %v328, %v335
        %vm358 = vcmp.eq.s32.totalorder %v328, %v342
        %vm359 = vcmp.eq.s32.totalorder %v328, %v349
        %vm360 = vcmp.eq.s32.totalorder %v328, %v356
        %v361 = vsel %vm357, 1, 0
        %v362 = vsel %vm358, 1, 0
        %v363 = vsel %vm359, 1, 0
        %v364 = vsel %vm360, 1, 0
        %v365 = vcvt.s32.f32 %v361
        %v366 = vcvt.s32.f32 %v362
        %v367 = vcvt.s32.f32 %v363
        %v368 = vcvt.s32.f32 %v364
        %v369 = vld [vmem:[%s259] sm:$0xff]
        %v370 = vld [vmem:[%s259 + $0x8] sm:$0xff]
        %v371 = vld [vmem:[%s259 + $0x10] sm:$0xff]
        %v372 = vld [vmem:[%s259 + $0x18] sm:$0xff]
        %v373 = vld [vmem:[%s259 + $0x20] sm:$0xff]
        %v374 = vld [vmem:[%s259 + $0x28] sm:$0xff]
        %v375 = vld [vmem:[%s259 + $0x30] sm:$0xff]
        %v376 = vld [vmem:[%s259 + $0x38] sm:$0xff]
        %s377 = scalar_lea.vmem %s259, 64 [#allocation2]
        %v378 = vld [vmem:[%s377] sm:$0xff]
        %v379 = vld [vmem:[%s377 + $0x8] sm:$0xff]
        %v380 = vld [vmem:[%s377 + $0x10] sm:$0xff]
        %v381 = vld [vmem:[%s377 + $0x18] sm:$0xff]
        %v382 = vld [vmem:[%s377 + $0x20] sm:$0xff]
        %v383 = vld [vmem:[%s377 + $0x28] sm:$0xff]
        %v384 = vld [vmem:[%s377 + $0x30] sm:$0xff]
        %v385 = vld [vmem:[%s377 + $0x38] sm:$0xff]
        %vm386 = vcmask 130048
        %v388 = vsel %vm386, %v365, 0
        %390 = vmatpush.msra.mxu0 0.0
        %391 = vmatpush.msra.mxu0 0.0
        %392 = vmatpush.msra.mxu0 0.0
        %393 = vmatpush.msra.mxu0 0.0
        %394 = vmatpush.msra.mxu0 0.0
        %395 = vmatpush.msra.mxu0 0.0
        %396 = vmatpush.msra.mxu0 0.0
        %397 = vmatpush.msra.mxu0 0.0
        %398 = vmatpush.msra.mxu0 0.0
        %399 = vmatpush.msra.mxu0 0.0
        %400 = vmatpush.msra.mxu0 0.0
        %401 = vmatpush.msra.mxu0 0.0
        %402 = vmatpush.msra.mxu0 0.0
        %403 = vmatpush.msra.mxu0 0.0
        %404 = vmatpush.msra.mxu0 %v379
        %405 = vmatpush.msra.mxu0 %v378
        %406 = vmatmul.f32.gmra.mxu0 %v388
        %v407 = vpop.f32.mrf.mxu0
        %v408 = vadd.f32 0.0, %v407
        %409 = vdwg.mxu0
        %v411 = vsel %vm386, %v366, 0
        %413 = vmatpush.msra.mxu0 0.0
        %414 = vmatpush.msra.mxu0 0.0
        %415 = vmatpush.msra.mxu0 0.0
        %416 = vmatpush.msra.mxu0 0.0
        %417 = vmatpush.msra.mxu0 0.0
        %418 = vmatpush.msra.mxu0 0.0
        %419 = vmatpush.msra.mxu0 0.0
        %420 = vmatpush.msra.mxu0 0.0
        %421 = vmatpush.msra.mxu0 0.0
        %422 = vmatpush.msra.mxu0 0.0
        %423 = vmatpush.msra.mxu0 0.0
        %424 = vmatpush.msra.mxu0 0.0
        %425 = vmatpush.msra.mxu0 0.0
        %426 = vmatpush.msra.mxu0 0.0
        %427 = vmatpush.msra.mxu0 %v381
        %428 = vmatpush.msra.mxu0 %v380
        %429 = vmatmul.f32.gmra.mxu0 %v411
        %v430 = vpop.f32.mrf.mxu0
        %v431 = vadd.f32 0.0, %v430
        %432 = vdwg.mxu0
        %v434 = vsel %vm386, %v367, 0
        %436 = vmatpush.msra.mxu0 0.0
        %437 = vmatpush.msra.mxu0 0.0
        %438 = vmatpush.msra.mxu0 0.0
        %439 = vmatpush.msra.mxu0 0.0
        %440 = vmatpush.msra.mxu0 0.0
        %441 = vmatpush.msra.mxu0 0.0
        %442 = vmatpush.msra.mxu0 0.0
        %443 = vmatpush.msra.mxu0 0.0
        %444 = vmatpush.msra.mxu0 0.0
        %445 = vmatpush.msra.mxu0 0.0
        %446 = vmatpush.msra.mxu0 0.0
        %447 = vmatpush.msra.mxu0 0.0
        %448 = vmatpush.msra.mxu0 0.0
        %449 = vmatpush.msra.mxu0 0.0
        %450 = vmatpush.msra.mxu0 %v383
        %451 = vmatpush.msra.mxu0 %v382
        %452 = vmatmul.f32.gmra.mxu0 %v434
        %v453 = vpop.f32.mrf.mxu0
        %v454 = vadd.f32 0.0, %v453
        %455 = vdwg.mxu0
        %v457 = vsel %vm386, %v368, 0
        %459 = vmatpush.msra.mxu0 0.0
        %460 = vmatpush.msra.mxu0 0.0
        %461 = vmatpush.msra.mxu0 0.0
        %462 = vmatpush.msra.mxu0 0.0
        %463 = vmatpush.msra.mxu0 0.0
        %464 = vmatpush.msra.mxu0 0.0
        %465 = vmatpush.msra.mxu0 0.0
        %466 = vmatpush.msra.mxu0 0.0
        %467 = vmatpush.msra.mxu0 0.0
        %468 = vmatpush.msra.mxu0 0.0
        %469 = vmatpush.msra.mxu0 0.0
        %470 = vmatpush.msra.mxu0 0.0
        %471 = vmatpush.msra.mxu0 0.0
        %472 = vmatpush.msra.mxu0 0.0
        %473 = vmatpush.msra.mxu0 %v385
        %474 = vmatpush.msra.mxu0 %v384
        %475 = vmatmul.f32.gmra.mxu0 %v457
        %v476 = vpop.f32.mrf.mxu0
        %v477 = vadd.f32 0.0, %v476
        %478 = vdwg.mxu0
        %479 = vmatpush.msra.mxu0 0.0
        %480 = vmatpush.msra.mxu0 0.0
        %481 = vmatpush.msra.mxu0 0.0
        %482 = vmatpush.msra.mxu0 0.0
        %483 = vmatpush.msra.mxu0 0.0
        %484 = vmatpush.msra.mxu0 0.0
        %485 = vmatpush.msra.mxu0 0.0
        %486 = vmatpush.msra.mxu0 0.0
        %487 = vmatpush.msra.mxu0 0.0
        %488 = vmatpush.msra.mxu0 0.0
        %489 = vmatpush.msra.mxu0 0.0
        %490 = vmatpush.msra.mxu0 0.0
        %491 = vmatpush.msra.mxu0 0.0
        %492 = vmatpush.msra.mxu0 0.0
        %493 = vmatpush.msra.mxu0 %v370
        %494 = vmatpush.msra.mxu0 %v369
        %495 = vmatmul.f32.gmra.mxu0 %v388
        %v496 = vpop.f32.mrf.mxu0
        %v497 = vadd.f32 %v408, %v496
        %498 = vdwg.mxu0
        %499 = vmatpush.msra.mxu0 0.0
        %500 = vmatpush.msra.mxu0 0.0
        %501 = vmatpush.msra.mxu0 0.0
        %502 = vmatpush.msra.mxu0 0.0
        %503 = vmatpush.msra.mxu0 0.0
        %504 = vmatpush.msra.mxu0 0.0
        %505 = vmatpush.msra.mxu0 0.0
        %506 = vmatpush.msra.mxu0 0.0
        %507 = vmatpush.msra.mxu0 0.0
        %508 = vmatpush.msra.mxu0 0.0
        %509 = vmatpush.msra.mxu0 0.0
        %510 = vmatpush.msra.mxu0 0.0
        %511 = vmatpush.msra.mxu0 0.0
        %512 = vmatpush.msra.mxu0 0.0
        %513 = vmatpush.msra.mxu0 %v372
        %514 = vmatpush.msra.mxu0 %v371
        %515 = vmatmul.f32.gmra.mxu0 %v411
        %v516 = vpop.f32.mrf.mxu0
        %v517 = vadd.f32 %v431, %v516
        %518 = vdwg.mxu0
        %519 = vmatpush.msra.mxu0 0.0
        %520 = vmatpush.msra.mxu0 0.0
        %521 = vmatpush.msra.mxu0 0.0
        %522 = vmatpush.msra.mxu0 0.0
        %523 = vmatpush.msra.mxu0 0.0
        %524 = vmatpush.msra.mxu0 0.0
        %525 = vmatpush.msra.mxu0 0.0
        %526 = vmatpush.msra.mxu0 0.0
        %527 = vmatpush.msra.mxu0 0.0
        %528 = vmatpush.msra.mxu0 0.0
        %529 = vmatpush.msra.mxu0 0.0
        %530 = vmatpush.msra.mxu0 0.0
        %531 = vmatpush.msra.mxu0 0.0
        %532 = vmatpush.msra.mxu0 0.0
        %533 = vmatpush.msra.mxu0 %v374
        %534 = vmatpush.msra.mxu0 %v373
        %535 = vmatmul.f32.gmra.mxu0 %v434
        %v536 = vpop.f32.mrf.mxu0
        %v537 = vadd.f32 %v454, %v536
        %538 = vdwg.mxu0
        %539 = vmatpush.msra.mxu0 0.0
        %540 = vmatpush.msra.mxu0 0.0
        %541 = vmatpush.msra.mxu0 0.0
        %542 = vmatpush.msra.mxu0 0.0
        %543 = vmatpush.msra.mxu0 0.0
        %544 = vmatpush.msra.mxu0 0.0
        %545 = vmatpush.msra.mxu0 0.0
        %546 = vmatpush.msra.mxu0 0.0
        %547 = vmatpush.msra.mxu0 0.0
        %548 = vmatpush.msra.mxu0 0.0
        %549 = vmatpush.msra.mxu0 0.0
        %550 = vmatpush.msra.mxu0 0.0
        %551 = vmatpush.msra.mxu0 0.0
        %552 = vmatpush.msra.mxu0 0.0
        %553 = vmatpush.msra.mxu0 %v376
        %554 = vmatpush.msra.mxu0 %v375
        %555 = vmatmul.f32.gmra.mxu0 %v457
        %v556 = vpop.f32.mrf.mxu0
        %v557 = vadd.f32 %v477, %v556
        %558 = vdwg.mxu0
        %s559 = scalar_lea.vmem %s259, 128 [#allocation2]
        %v560 = vld [vmem:[%s559] sm:$0xff]
        %v561 = vld [vmem:[%s559 + $0x8] sm:$0xff]
        %v562 = vld [vmem:[%s559 + $0x10] sm:$0xff]
        %v563 = vld [vmem:[%s559 + $0x18] sm:$0xff]
        %v564 = vld [vmem:[%s559 + $0x20] sm:$0xff]
        %v565 = vld [vmem:[%s559 + $0x28] sm:$0xff]
        %v566 = vld [vmem:[%s559 + $0x30] sm:$0xff]
        %v567 = vld [vmem:[%s559 + $0x38] sm:$0xff]
        %568 = vmatpush.msra.mxu0 0.0
        %569 = vmatpush.msra.mxu0 0.0
        %570 = vmatpush.msra.mxu0 0.0
        %571 = vmatpush.msra.mxu0 0.0
        %572 = vmatpush.msra.mxu0 0.0
        %573 = vmatpush.msra.mxu0 0.0
        %574 = vmatpush.msra.mxu0 0.0
        %575 = vmatpush.msra.mxu0 0.0
        %576 = vmatpush.msra.mxu0 0.0
        %577 = vmatpush.msra.mxu0 0.0
        %578 = vmatpush.msra.mxu0 0.0
        %579 = vmatpush.msra.mxu0 0.0
        %580 = vmatpush.msra.mxu0 0.0
        %581 = vmatpush.msra.mxu0 0.0
        %582 = vmatpush.msra.mxu0 %v561
        %583 = vmatpush.msra.mxu0 %v560
        %584 = vmatmul.f32.gmra.mxu0 %v388
        %v585 = vpop.f32.mrf.mxu0
        %v586 = vadd.f32 0.0, %v585
        %587 = vdwg.mxu0
        %588 = vmatpush.msra.mxu0 0.0
        %589 = vmatpush.msra.mxu0 0.0
        %590 = vmatpush.msra.mxu0 0.0
        %591 = vmatpush.msra.mxu0 0.0
        %592 = vmatpush.msra.mxu0 0.0
        %593 = vmatpush.msra.mxu0 0.0
        %594 = vmatpush.msra.mxu0 0.0
        %595 = vmatpush.msra.mxu0 0.0
        %596 = vmatpush.msra.mxu0 0.0
        %597 = vmatpush.msra.mxu0 0.0
        %598 = vmatpush.msra.mxu0 0.0
        %599 = vmatpush.msra.mxu0 0.0
        %600 = vmatpush.msra.mxu0 0.0
        %601 = vmatpush.msra.mxu0 0.0
        %602 = vmatpush.msra.mxu0 %v563
        %603 = vmatpush.msra.mxu0 %v562
        %604 = vmatmul.f32.gmra.mxu0 %v411
        %v605 = vpop.f32.mrf.mxu0
        %v606 = vadd.f32 0.0, %v605
        %607 = vdwg.mxu0
        %608 = vmatpush.msra.mxu0 0.0
        %609 = vmatpush.msra.mxu0 0.0
        %610 = vmatpush.msra.mxu0 0.0
        %611 = vmatpush.msra.mxu0 0.0
        %612 = vmatpush.msra.mxu0 0.0
        %613 = vmatpush.msra.mxu0 0.0
        %614 = vmatpush.msra.mxu0 0.0
        %615 = vmatpush.msra.mxu0 0.0
        %616 = vmatpush.msra.mxu0 0.0
        %617 = vmatpush.msra.mxu0 0.0
        %618 = vmatpush.msra.mxu0 0.0
        %619 = vmatpush.msra.mxu0 0.0
        %620 = vmatpush.msra.mxu0 0.0
        %621 = vmatpush.msra.mxu0 0.0
        %622 = vmatpush.msra.mxu0 %v565
        %623 = vmatpush.msra.mxu0 %v564
        %624 = vmatmul.f32.gmra.mxu0 %v434
        %v625 = vpop.f32.mrf.mxu0
        %v626 = vadd.f32 0.0, %v625
        %627 = vdwg.mxu0
        %628 = vmatpush.msra.mxu0 0.0
        %629 = vmatpush.msra.mxu0 0.0
        %630 = vmatpush.msra.mxu0 0.0
        %631 = vmatpush.msra.mxu0 0.0
        %632 = vmatpush.msra.mxu0 0.0
        %633 = vmatpush.msra.mxu0 0.0
        %634 = vmatpush.msra.mxu0 0.0
        %635 = vmatpush.msra.mxu0 0.0
        %636 = vmatpush.msra.mxu0 0.0
        %637 = vmatpush.msra.mxu0 0.0
        %638 = vmatpush.msra.mxu0 0.0
        %639 = vmatpush.msra.mxu0 0.0
        %640 = vmatpush.msra.mxu0 0.0
        %641 = vmatpush.msra.mxu0 0.0
        %642 = vmatpush.msra.mxu0 %v567
        %643 = vmatpush.msra.mxu0 %v566
        %644 = vmatmul.f32.gmra.mxu0 %v457
        %v645 = vpop.f32.mrf.mxu0
        %v646 = vadd.f32 0.0, %v645
        %647 = vdwg.mxu0
        %v648 = vadd.f32 %v497, %v586
        %v649 = vadd.f32 %v517, %v606
        %v650 = vadd.f32 %v537, %v626
        %v651 = vadd.f32 %v557, %v646
        %s652 = scalar_lea.vmem %s259, 192 [#allocation2]
        %v653 = vld [vmem:[%s652] sm:$0xff]
        %v654 = vld [vmem:[%s652 + $0x8] sm:$0xff]
        %v655 = vld [vmem:[%s652 + $0x10] sm:$0xff]
        %v656 = vld [vmem:[%s652 + $0x18] sm:$0xff]
        %v657 = vld [vmem:[%s652 + $0x20] sm:$0xff]
        %v658 = vld [vmem:[%s652 + $0x28] sm:$0xff]
        %v659 = vld [vmem:[%s652 + $0x30] sm:$0xff]
        %v660 = vld [vmem:[%s652 + $0x38] sm:$0xff]
        %661 = vmatpush.msra.mxu0 0.0
        %662 = vmatpush.msra.mxu0 0.0
        %663 = vmatpush.msra.mxu0 0.0
        %664 = vmatpush.msra.mxu0 0.0
        %665 = vmatpush.msra.mxu0 0.0
        %666 = vmatpush.msra.mxu0 0.0
        %667 = vmatpush.msra.mxu0 0.0
        %668 = vmatpush.msra.mxu0 0.0
        %669 = vmatpush.msra.mxu0 0.0
        %670 = vmatpush.msra.mxu0 0.0
        %671 = vmatpush.msra.mxu0 0.0
        %672 = vmatpush.msra.mxu0 0.0
        %673 = vmatpush.msra.mxu0 0.0
        %674 = vmatpush.msra.mxu0 0.0
        %675 = vmatpush.msra.mxu0 %v654
        %676 = vmatpush.msra.mxu0 %v653
        %677 = vmatmul.f32.gmra.mxu0 %v388
        %v678 = vpop.f32.mrf.mxu0
        %v679 = vadd.f32 0.0, %v678
        %680 = vdwg.mxu0
        %681 = vmatpush.msra.mxu0 0.0
        %682 = vmatpush.msra.mxu0 0.0
        %683 = vmatpush.msra.mxu0 0.0
        %684 = vmatpush.msra.mxu0 0.0
        %685 = vmatpush.msra.mxu0 0.0
        %686 = vmatpush.msra.mxu0 0.0
        %687 = vmatpush.msra.mxu0 0.0
        %688 = vmatpush.msra.mxu0 0.0
        %689 = vmatpush.msra.mxu0 0.0
        %690 = vmatpush.msra.mxu0 0.0
        %691 = vmatpush.msra.mxu0 0.0
        %692 = vmatpush.msra.mxu0 0.0
        %693 = vmatpush.msra.mxu0 0.0
        %694 = vmatpush.msra.mxu0 0.0
        %695 = vmatpush.msra.mxu0 %v656
        %696 = vmatpush.msra.mxu0 %v655
        %697 = vmatmul.f32.gmra.mxu0 %v411
        %v698 = vpop.f32.mrf.mxu0
        %v699 = vadd.f32 0.0, %v698
        %700 = vdwg.mxu0
        %701 = vmatpush.msra.mxu0 0.0
        %702 = vmatpush.msra.mxu0 0.0
        %703 = vmatpush.msra.mxu0 0.0
        %704 = vmatpush.msra.mxu0 0.0
        %705 = vmatpush.msra.mxu0 0.0
        %706 = vmatpush.msra.mxu0 0.0
        %707 = vmatpush.msra.mxu0 0.0
        %708 = vmatpush.msra.mxu0 0.0
        %709 = vmatpush.msra.mxu0 0.0
        %710 = vmatpush.msra.mxu0 0.0
        %711 = vmatpush.msra.mxu0 0.0
        %712 = vmatpush.msra.mxu0 0.0
        %713 = vmatpush.msra.mxu0 0.0
        %714 = vmatpush.msra.mxu0 0.0
        %715 = vmatpush.msra.mxu0 %v658
        %716 = vmatpush.msra.mxu0 %v657
        %717 = vmatmul.f32.gmra.mxu0 %v434
        %v718 = vpop.f32.mrf.mxu0
        %v719 = vadd.f32 0.0, %v718
        %720 = vdwg.mxu0
        %721 = vmatpush.msra.mxu0 0.0
        %722 = vmatpush.msra.mxu0 0.0
        %723 = vmatpush.msra.mxu0 0.0
        %724 = vmatpush.msra.mxu0 0.0
        %725 = vmatpush.msra.mxu0 0.0
        %726 = vmatpush.msra.mxu0 0.0
        %727 = vmatpush.msra.mxu0 0.0
        %728 = vmatpush.msra.mxu0 0.0
        %729 = vmatpush.msra.mxu0 0.0
        %730 = vmatpush.msra.mxu0 0.0
        %731 = vmatpush.msra.mxu0 0.0
        %732 = vmatpush.msra.mxu0 0.0
        %733 = vmatpush.msra.mxu0 0.0
        %734 = vmatpush.msra.mxu0 0.0
        %735 = vmatpush.msra.mxu0 %v660
        %736 = vmatpush.msra.mxu0 %v659
        %737 = vmatmul.f32.gmra.mxu0 %v457
        %v738 = vpop.f32.mrf.mxu0
        %v739 = vadd.f32 0.0, %v738
        %740 = vdwg.mxu0
        %v741 = vadd.f32 %v648, %v679
        %v742 = vadd.f32 %v649, %v699
        %v743 = vadd.f32 %v650, %v719
        %v744 = vadd.f32 %v651, %v739
        %v745 = vmul.f32 %v741, %v741
        %v746 = vmul.f32 %v742, %v742
        %v747 = vmul.f32 %v743, %v743
        %v748 = vmul.f32 %v744, %v744
        %vm749 = vcmask 257024
        %v750 = vsel %vm749, %v745, 0.0
        %751 = vadd.xlane.f32.xlu0 %v750
        %v752 = vpop.xlane.xlu0 %751
        %v753 = vsel %vm749, %v746, 0.0
        %754 = vadd.xlane.f32.xlu0 %v753
        %v755 = vpop.xlane.xlu0 %754
        %v756 = vsel %vm749, %v747, 0.0
        %757 = vadd.xlane.f32.xlu0 %v756
        %v758 = vpop.xlane.xlu0 %757
        %v759 = vsel %vm749, %v748, 0.0
        %760 = vadd.xlane.f32.xlu0 %v759
        %v761 = vpop.xlane.xlu0 %760
        %v762 = vmul.f32 %v752, 2.0
        %v763 = vmul.f32 %v755, 2.0
        %v764 = vmul.f32 %v758, 2.0
        %v765 = vmul.f32 %v761, 2.0
        %v766 = vmax.f32 %v762, 1e-24
        %v767 = vmax.f32 %v763, 1e-24
        %v768 = vmax.f32 %v764, 1e-24
        %v769 = vmax.f32 %v765, 1e-24
        %v770 = vrsqrt.pop %v766
        %v771 = vmul.f32 %v770, %v766
        %v772 = vmul.f32 %v771, %v770
        %v773 = vmul.f32 0.5, %v772
        %v774 = vsub.f32 1.5, %v773
        %v775 = vmul.f32 %v770, %v774
        %vm776 = vweird.f32 %v766
        %vm777 = vweird.f32 %v770
        %vm778 = vmor %vm776, %vm777
        %v779 = vsel %vm778, %v770, %v775
        %v780 = vrsqrt.pop %v767
        %v781 = vmul.f32 %v780, %v767
        %v782 = vmul.f32 %v781, %v780
        %v783 = vmul.f32 0.5, %v782
        %v784 = vsub.f32 1.5, %v783
        %v785 = vmul.f32 %v780, %v784
        %vm786 = vweird.f32 %v767
        %vm787 = vweird.f32 %v780
        %vm788 = vmor %vm786, %vm787
        %v789 = vsel %vm788, %v780, %v785
        %v790 = vrsqrt.pop %v768
        %v791 = vmul.f32 %v790, %v768
        %v792 = vmul.f32 %v791, %v790
        %v793 = vmul.f32 0.5, %v792
        %v794 = vsub.f32 1.5, %v793
        %v795 = vmul.f32 %v790, %v794
        %vm796 = vweird.f32 %v768
        %vm797 = vweird.f32 %v790
        %vm798 = vmor %vm796, %vm797
        %v799 = vsel %vm798, %v790, %v795
        %v800 = vrsqrt.pop %v769
        %v801 = vmul.f32 %v800, %v769
        %v802 = vmul.f32 %v801, %v800
        %v803 = vmul.f32 0.5, %v802
        %v804 = vsub.f32 1.5, %v803
        %v805 = vmul.f32 %v800, %v804
        %vm806 = vweird.f32 %v769
        %vm807 = vweird.f32 %v800
        %vm808 = vmor %vm806, %vm807
        %v809 = vsel %vm808, %v800, %v805
        %v810 = vmul.f32 %v741, %v779
        %v811 = vmul.f32 %v742, %v789
        %v812 = vmul.f32 %v743, %v799
        %v813 = vmul.f32 %v744, %v809
        %818 = vrot.lane.b32.xlu0 %v810, 32
        %v819 = vpop.permute.xlu0 %818
        %820 = vrot.lane.b32.xlu0 %v811, 32
        %v821 = vpop.permute.xlu0 %820
        %822 = vrot.lane.b32.xlu0 %v812, 32
        %v823 = vpop.permute.xlu0 %822
        %824 = vrot.lane.b32.xlu0 %v813, 32
        %v825 = vpop.permute.xlu0 %824
        %vm830 = vcmask 261120
        %v831 = vsel %vm830, %v810, %v819
        %v832 = vsel %vm830, %v811, %v821
        %v833 = vsel %vm830, %v812, %v823
        %v834 = vsel %vm830, %v813, %v825
        %vm835 = vcmask 519168
        %836 = vst.msk [vmem:[%s301] sm:$0xf] %vm835, %v831
        %837 = vst.msk [vmem:[%s301 + $0x4] sm:$0xf] %vm835, %v832
        %838 = vst.msk [vmem:[%s301 + $0x8] sm:$0xf] %vm835, %v833
        %839 = vst.msk [vmem:[%s301 + $0xc] sm:$0xf] %vm835, %v834
        %v840 = vld [vmem:[%s269] sm:$0x3]
        %v841 = vld [vmem:[%s269 + $0x2] sm:$0x3]
        %v842 = vld [vmem:[%s269 + $0x4] sm:$0x3]
        %v843 = vld [vmem:[%s269 + $0x6] sm:$0x3]
        %v844 = vld [vmem:[%s269 + $0x8] sm:$0x3]
        %v845 = vld [vmem:[%s269 + $0xa] sm:$0x3]
        %v846 = vld [vmem:[%s269 + $0xc] sm:$0x3]
        %v847 = vld [vmem:[%s269 + $0xe] sm:$0x3]
        %v848 = vld [vmem:[%s269 + $0x10] sm:$0x3]
        %v849 = vld [vmem:[%s269 + $0x12] sm:$0x3]
        %v850 = vld [vmem:[%s269 + $0x14] sm:$0x3]
        %v851 = vld [vmem:[%s269 + $0x16] sm:$0x3]
        %v852 = vld [vmem:[%s269 + $0x18] sm:$0x3]
        %v853 = vld [vmem:[%s269 + $0x1a] sm:$0x3]
        %v854 = vld [vmem:[%s269 + $0x1c] sm:$0x3]
        %v855 = vld [vmem:[%s269 + $0x1e] sm:$0x3]
        %872 = vrot.lane.b32.xlu0 %v840, 96
        %v873 = vpop.permute.xlu0 %872
        %874 = vrot.lane.b32.xlu0 %v841, 96
        %v875 = vpop.permute.xlu0 %874
        %876 = vrot.lane.b32.xlu0 %v842, 96
        %v877 = vpop.permute.xlu0 %876
        %878 = vrot.lane.b32.xlu0 %v843, 96
        %v879 = vpop.permute.xlu0 %878
        %880 = vrot.lane.b32.xlu0 %v844, 96
        %v881 = vpop.permute.xlu0 %880
        %882 = vrot.lane.b32.xlu0 %v845, 96
        %v883 = vpop.permute.xlu0 %882
        %884 = vrot.lane.b32.xlu0 %v846, 96
        %v885 = vpop.permute.xlu0 %884
        %886 = vrot.lane.b32.xlu0 %v847, 96
        %v887 = vpop.permute.xlu0 %886
        %888 = vrot.lane.b32.xlu0 %v848, 96
        %v889 = vpop.permute.xlu0 %888
        %890 = vrot.lane.b32.xlu0 %v849, 96
        %v891 = vpop.permute.xlu0 %890
        %892 = vrot.lane.b32.xlu0 %v850, 96
        %v893 = vpop.permute.xlu0 %892
        %894 = vrot.lane.b32.xlu0 %v851, 96
        %v895 = vpop.permute.xlu0 %894
        %896 = vrot.lane.b32.xlu0 %v852, 96
        %v897 = vpop.permute.xlu0 %896
        %898 = vrot.lane.b32.xlu0 %v853, 96
        %v899 = vpop.permute.xlu0 %898
        %900 = vrot.lane.b32.xlu0 %v854, 96
        %v901 = vpop.permute.xlu0 %900
        %902 = vrot.lane.b32.xlu0 %v855, 96
        %v903 = vpop.permute.xlu0 %902
        %v920 = vadd.f32 %v840, %v873
        %v921 = vadd.f32 %v841, %v875
        %v922 = vadd.f32 %v842, %v877
        %v923 = vadd.f32 %v843, %v879
        %v924 = vadd.f32 %v844, %v881
        %v925 = vadd.f32 %v845, %v883
        %v926 = vadd.f32 %v846, %v885
        %v927 = vadd.f32 %v847, %v887
        %v928 = vadd.f32 %v848, %v889
        %v929 = vadd.f32 %v849, %v891
        %v930 = vadd.f32 %v850, %v893
        %v931 = vadd.f32 %v851, %v895
        %v932 = vadd.f32 %v852, %v897
        %v933 = vadd.f32 %v853, %v899
        %v934 = vadd.f32 %v854, %v901
        %v935 = vadd.f32 %v855, %v903
        %v936 = vrot.slane %v810, 1
        %v937 = vrot.slane %v810, 2
        %v938 = vrot.slane %v810, 3
        %v939 = vrot.slane %v811, 1
        %v940 = vrot.slane %v811, 2
        %v941 = vrot.slane %v811, 3
        %v942 = vrot.slane %v812, 1
        %v943 = vrot.slane %v812, 2
        %v944 = vrot.slane %v812, 3
        %v945 = vrot.slane %v813, 1
        %v946 = vrot.slane %v813, 2
        %v947 = vrot.slane %v813, 3
        %v948 = vperm.slane %v810, 0
        %v949 = vperm.slane %v936, 0
        %v950 = vperm.slane %v937, 0
        %v951 = vperm.slane %v938, 0
        %v952 = vperm.slane %v811, 0
        %v953 = vperm.slane %v939, 0
        %v954 = vperm.slane %v940, 0
        %v955 = vperm.slane %v941, 0
        %v956 = vperm.slane %v812, 0
        %v957 = vperm.slane %v942, 0
        %v958 = vperm.slane %v943, 0
        %v959 = vperm.slane %v944, 0
        %v960 = vperm.slane %v813, 0
        %v961 = vperm.slane %v945, 0
        %v962 = vperm.slane %v946, 0
        %v963 = vperm.slane %v947, 0
        %v980 = vmul.f32 %v948, %v920
        %v981 = vmul.f32 %v949, %v921
        %v982 = vmul.f32 %v950, %v922
        %v983 = vmul.f32 %v951, %v923
        %v984 = vmul.f32 %v952, %v924
        %v985 = vmul.f32 %v953, %v925
        %v986 = vmul.f32 %v954, %v926
        %v987 = vmul.f32 %v955, %v927
        %v988 = vmul.f32 %v956, %v928
        %v989 = vmul.f32 %v957, %v929
        %v990 = vmul.f32 %v958, %v930
        %v991 = vmul.f32 %v959, %v931
        %v992 = vmul.f32 %v960, %v932
        %v993 = vmul.f32 %v961, %v933
        %v994 = vmul.f32 %v962, %v934
        %v995 = vmul.f32 %v963, %v935
        %vm996 = vcmask 254976
        %v997 = vsel %vm996, %v980, 0.0
        %998 = vadd.xlane.f32.xlu0 %v997
        %v999 = vpop.xlane.xlu0 %998
        %v1000 = vsel %vm996, %v981, 0.0
        %1001 = vadd.xlane.f32.xlu0 %v1000
        %v1002 = vpop.xlane.xlu0 %1001
        %v1003 = vsel %vm996, %v982, 0.0
        %1004 = vadd.xlane.f32.xlu0 %v1003
        %v1005 = vpop.xlane.xlu0 %1004
        %v1006 = vsel %vm996, %v983, 0.0
        %1007 = vadd.xlane.f32.xlu0 %v1006
        %v1008 = vpop.xlane.xlu0 %1007
        %v1009 = vsel %vm996, %v984, 0.0
        %1010 = vadd.xlane.f32.xlu0 %v1009
        %v1011 = vpop.xlane.xlu0 %1010
        %v1012 = vsel %vm996, %v985, 0.0
        %1013 = vadd.xlane.f32.xlu0 %v1012
        %v1014 = vpop.xlane.xlu0 %1013
        %v1015 = vsel %vm996, %v986, 0.0
        %1016 = vadd.xlane.f32.xlu0 %v1015
        %v1017 = vpop.xlane.xlu0 %1016
        %v1018 = vsel %vm996, %v987, 0.0
        %1019 = vadd.xlane.f32.xlu0 %v1018
        %v1020 = vpop.xlane.xlu0 %1019
        %v1021 = vsel %vm996, %v988, 0.0
        %1022 = vadd.xlane.f32.xlu0 %v1021
        %v1023 = vpop.xlane.xlu0 %1022
        %v1024 = vsel %vm996, %v989, 0.0
        %1025 = vadd.xlane.f32.xlu0 %v1024
        %v1026 = vpop.xlane.xlu0 %1025
        %v1027 = vsel %vm996, %v990, 0.0
        %1028 = vadd.xlane.f32.xlu0 %v1027
        %v1029 = vpop.xlane.xlu0 %1028
        %v1030 = vsel %vm996, %v991, 0.0
        %1031 = vadd.xlane.f32.xlu0 %v1030
        %v1032 = vpop.xlane.xlu0 %1031
        %v1033 = vsel %vm996, %v992, 0.0
        %1034 = vadd.xlane.f32.xlu0 %v1033
        %v1035 = vpop.xlane.xlu0 %1034
        %v1036 = vsel %vm996, %v993, 0.0
        %1037 = vadd.xlane.f32.xlu0 %v1036
        %v1038 = vpop.xlane.xlu0 %1037
        %v1039 = vsel %vm996, %v994, 0.0
        %1040 = vadd.xlane.f32.xlu0 %v1039
        %v1041 = vpop.xlane.xlu0 %1040
        %v1042 = vsel %vm996, %v995, 0.0
        %1043 = vadd.xlane.f32.xlu0 %v1042
        %v1044 = vpop.xlane.xlu0 %1043
        %v1061 = vperm.slane %v999, %v328
        %v1062 = vperm.slane %v1002, %v328
        %v1063 = vperm.slane %v1005, %v328
        %v1064 = vperm.slane %v1008, %v328
        %v1065 = vperm.slane %v1011, %v328
        %v1066 = vperm.slane %v1014, %v328
        %v1067 = vperm.slane %v1017, %v328
        %v1068 = vperm.slane %v1020, %v328
        %v1069 = vperm.slane %v1023, %v328
        %v1070 = vperm.slane %v1026, %v328
        %v1071 = vperm.slane %v1029, %v328
        %v1072 = vperm.slane %v1032, %v328
        %v1073 = vperm.slane %v1035, %v328
        %v1074 = vperm.slane %v1038, %v328
        %v1075 = vperm.slane %v1041, %v328
        %v1076 = vperm.slane %v1044, %v328
        %vm1077 = vcmask 1041409
        %v1078 = vsel %vm1077, %v1062, %v1061
        %vm1079 = vcmask 1042434
        %v1080 = vsel %vm1079, %v1063, %v1078
        %vm1081 = vcmask 1043459
        %v1082 = vsel %vm1081, %v1064, %v1080
        %v1083 = vsel %vm1077, %v1066, %v1065
        %v1084 = vsel %vm1079, %v1067, %v1083
        %v1085 = vsel %vm1081, %v1068, %v1084
        %v1086 = vsel %vm1077, %v1070, %v1069
        %v1087 = vsel %vm1079, %v1071, %v1086
        %v1088 = vsel %vm1081, %v1072, %v1087
        %v1089 = vsel %vm1077, %v1074, %v1073
        %v1090 = vsel %vm1079, %v1075, %v1089
        %v1091 = vsel %vm1081, %v1076, %v1090
        %vm1096 = vcmask 11264
        %1097 = vst.msk [vmem:[%s321] sm:$0xf] %vm1096, %v1082
        %1098 = vst.msk [vmem:[%s321 + $0x4] sm:$0xf] %vm1096, %v1085
        %1099 = vst.msk [vmem:[%s321 + $0x8] sm:$0xf] %vm1096, %v1088
        %1100 = vst.msk [vmem:[%s321 + $0xc] sm:$0xf] %vm1096, %v1091
        %s1101 = sand.u32 %s111, 1
        %s1102 = scalar_lea.sflag [#allocation4], %s1101
        %s1103 = sand.u32 %s111, 1
        %s1104 = smul.addr %s1103, 16
        %s1105 = scalar_lea.vmem [#allocation7], %s1104
        %s1106 = smul.u32 4, %s25
        %p1107 = scmp.lt.s32.totalorder %s1106, 7
        %s1108 = scalar_select %p1107, %s1106, 7
        %s1109 = smul.addr %s1108, 4
        %s1110 = scalar_lea.vmem %s4, %s1109
        // Predicated region
        $region41: #{tpu_custom_call.1} parent=31 // pred_check
          %p1111 = pneg %p121
        $region42: #{tpu_custom_call.1} parent=31 // pred_check_branch
          %1113 = sbr.rel (%p1111) target = $region44
        $region43: #{tpu_custom_call.1} parent=31 // pred_region
          %s1114 = smul.u32 4, %s25
          %1116 = vsyncadd %s1102, 0
          %s1117 = smul.addr %s1114, 4
          %s1118 = scalar_lea.hbm %s3, %s1117
          %s1119 = sshll.u32 %s1105, 4
          %s1120 = int_to_ptr.vmem [resolvable:$true] %s1119
          %s1121 = sshll.u32 %s1118, 4
          %s1122 = int_to_ptr.hbm [resolvable:$true] %s1121
          %1127 = dma.vmem_to_hbm [thread:$0]  %s1120, 256, %s1122, %s1102, 64, 64, 4
        $region44: #{tpu_custom_call.1} parent=31 // pred_fallthru
          _
        // Predicated region
        $region45: #{tpu_custom_call.1} parent=31 // pred_check
          %p1128 = pneg %p147
        $region46: #{tpu_custom_call.1} parent=31 // pred_check_branch
          %1130 = sbr.rel (%p1128) target = $region48
        $region47: #{tpu_custom_call.1} parent=31 // pred_region
          %s1131 = smul.u32 4, %s25
        $region48: #{tpu_custom_call.1} parent=31 // pred_fallthru
          _
      $region32: #{tpu_custom_call.1} parent=5 // pred_fallthru
        _
      %p1132 = scmp.le.s32.totalorder 2, %s20
      // Predicated region
      $region49: #{tpu_custom_call.1} parent=5 // pred_check
        %p1133 = pneg %p1132
      $region50: #{tpu_custom_call.1} parent=5 // pred_check_branch
        %1135 = sbr.rel (%p1133) target = $region52
      $region51: #{tpu_custom_call.1} parent=5 // pred_region
        %s1136 = ssub.s32 %s20, 2
        // Predicated region
        $region53: #{tpu_custom_call.1} parent=51 // pred_check
          %p1137 = pneg %p127
        $region54: #{tpu_custom_call.1} parent=51 // pred_check_branch
          %1139 = sbr.rel (%p1137) target = $region56
        $region55: #{tpu_custom_call.1} parent=51 // pred_region
          %s1140 = sand.u32 %s112, 1
          %s1141 = scalar_lea.sflag [#allocation4], %s1140
          %s1142 = sand.u32 %s112, 1
          %s1143 = smul.addr %s1142, 16
          %s1144 = scalar_lea.vmem [#allocation7], %s1143
          %1146 = dma.done %s1141, 256
        $region56: #{tpu_custom_call.1} parent=51 // pred_fallthru
          _
        // Predicated region
        $region57: #{tpu_custom_call.1} parent=51 // pred_check
          %p1147 = pneg %p153
        $region58: #{tpu_custom_call.1} parent=51 // pred_check_branch
          %1149 = sbr.rel (%p1147) target = $region60
        $region59: #{tpu_custom_call.1} parent=51 // pred_region
          %s1150 = smul.u32 4, %s26
          %p1151 = scmp.lt.s32.totalorder %s1150, 7
          %s1152 = scalar_select %p1151, %s1150, 7
          %s1153 = smul.addr %s1152, 4
          %s1154 = scalar_lea.vmem %s4, %s1153
        $region60: #{tpu_custom_call.1} parent=51 // pred_fallthru
          _
      $region52: #{tpu_custom_call.1} parent=5 // pred_fallthru
        _
    $region6: #{tpu_custom_call.1} parent=1 // loop_footer
      %s24 = sadd.s32 1, %s20
    $region7: #{tpu_custom_call.1} parent=1 // loop_footer_branch
      %19 = sbr.rel target = $region3
    $region8: #{tpu_custom_call.1} parent=1 // loop_exit
      _
    %1155 = vsyncpa [#allocation3], 1
    %s1156 = scalar_lea.sflag [#allocation3], 1
    %1157 = vsyncpa %s1156, 1
    %1158 = vsyncpa [#allocation6], 1
    %s1159 = scalar_lea.sflag [#allocation6], 1
    %1160 = vsyncpa %s1159, 1
    %1161 = vsyncpa [#allocation4], 1
    %s1162 = scalar_lea.sflag [#allocation4], 1
    %1163 = vsyncpa %s1162, 1

</llo_original>
